<compile_context>
chip_gen: v7x
topology: tpu7x:2x2x1
jax: 0.10.0
libtpu: 0.0.40
codegen_flags: <defaults>
</compile_context>

<pallas_src>
import math
import functools

import jax
import jax.numpy as jnp
from jax import lax
from jax.experimental import pallas as pl
from jax.experimental.pallas import tpu as pltpu


def make_dct_matrix(block_size: int) -> jnp.ndarray:
    """DCT-II basis matrix Q, exactly as in DCT2.__init__."""
    q = [[0.0] * block_size for _ in range(block_size)]
    for j in range(block_size):
        q[0][j] = math.sqrt(1.0 / float(block_size))
    for i in range(1, block_size):
        for j in range(block_size):
            q[i][j] = math.sqrt(2.0 / float(block_size)) * math.cos(
                float((2 * j + 1) * math.pi * i) / float(2.0 * block_size)
            )
    return jnp.asarray(q, dtype=jnp.float32)


def _tpu_policy():
    """Per-generation tuning: MXU-native operator cap, per-step bytes, VMEM limit."""
    kind = ""
    try:
        kind = jax.devices()[0].device_kind.lower()
    except Exception:
        pass

    vmem_phys = None
    try:
        info = pltpu.get_tpu_info()
        for name in ("vmem_capacity_bytes", "vmem_size_bytes", "vmem_bytes"):
            v = getattr(info, name, None)
            if v:
                vmem_phys = int(v)
                break
    except Exception:
        pass
    if vmem_phys is None:
        # v5e/v6e have 128 MiB VMEM; v7x has 64 MiB; be conservative if unknown.
        vmem_phys = (128 << 20) if any(s in kind for s in ("v5", "v6")) else (64 << 20)

    # MXU-native contraction size: 128 on <= v5 (4x128^2), 256 on v6e/v7x (2x256^2).
    op_cap = 128 if any(s in kind for s in ("v2", "v3", "v4", "v5")) else 256

    if vmem_phys >= (96 << 20):
        # v5e/v6e: big per-step tiles amortize ~0.35us/step and lengthen DMA bursts.
        return op_cap, 6 << 20, 96 << 20
    # v7x: only 64 MiB VMEM -> modest steps and a 48 MiB scoped limit.
    return op_cap, 2 << 20, 48 << 20


def _choose_spatial_tile(dim: int, bs: int, target: int, hw_align: int) -> int:
    """Largest t <= target with t % lcm(bs, hw_align) == 0 and dim % t == 0."""
    if dim <= target:
        return dim
    step = bs * hw_align // math.gcd(bs, hw_align)
    best = None
    t = step
    while t <= target:
        if dim % t == 0:
            best = t
        t += step
    # TODO(synk): pad-and-mask for dims with no aligned divisor <= target instead
    # of falling back to a (possibly huge) full-extent tile.
    return best if best is not None else dim


def _choose_op_chunk(tile: int, bs: int, cap: int, align: int) -> int:
    """Operator chunk: largest aligned multiple of bs that divides `tile` and is
    <= cap.  kron(I, Q) is block-diagonal, so applying it per chunk is exact."""
    if tile <= cap:
        return tile
    step = bs * align // math.gcd(bs, align)
    best = None
    t = step
    while t <= cap:
        if tile % t == 0:
            best = t
        t += step
    return best if best is not None else tile


def _choose_batch_tile(n: int, per_image_bytes: int, target_bytes: int,
                       max_bt: int) -> int:
    best = 1
    for bt in range(1, max(1, max_bt) + 1):
        if n % bt == 0 and bt * per_image_bytes <= target_bytes:
            best = bt
    return best


def _dct2_kernel(x_ref, qwt_ref, qh_ref, o_ref, *, rgb: bool):
    bt, c, th, tw = x_ref.shape
    ow = qwt_ref.shape[0]
    oh = qh_ref.shape[0]
    nw = tw // ow
    nh = th // oh
    btc = bt * c

    x = x_ref[...]                                   # (Bt, C, Th, Tw), f32

    if rgb:
        # rgb_to_ycbcr with the *255 / /255 round trip removed (it cancels):
        r = x[:, 0]
        g = x[:, 1]
        b = x[:, 2]
        y = 0.299 * r + 0.587 * g + 0.114 * b
        cb = -0.168736 * r - 0.331264 * g + 0.5 * b + (128.0 / 255.0)
        cr = 0.5 * r - 0.418688 * g - 0.081312 * b + (128.0 / 255.0)
        x = jnp.stack([y, cb, cr], axis=1)

    qwt = qwt_ref[...]                               # (ow, ow) = kron(I, Q)^T
    qh = qh_ref[...]                                 # (oh, oh) = kron(I, Q)

    # ---- Column (W) DCT: wide lane-dense right matmuls, M = Bt*C*Th, applied
    # per lane-aligned operator-width chunk (block-diagonal => exact).
    x2 = x.reshape(btc * th, tw)
    if nw == 1:
        t2 = jnp.dot(x2, qwt, preferred_element_type=jnp.float32)
    else:
        t2 = jnp.concatenate(
            [jnp.dot(x2[:, j * ow:(j + 1) * ow], qwt,
                     preferred_element_type=jnp.float32)
             for j in range(nw)],
            axis=-1)

    # ---- Row (H) DCT: batched left matmul contracting the sublane (Th) axis
    # directly — no lane<->sublane transposes; Tw stays the lane dimension.
    t3 = t2.reshape(btc, th, tw)
    qh_b = jnp.broadcast_to(qh, (btc, oh, oh))
    dn = (((2,), (1,)), ((0,), (0,)))                # contract qh cols with t3 rows
    if nh == 1:
        u = lax.dot_general(qh_b, t3, dn, preferred_element_type=jnp.float32)
    else:
        u = jnp.concatenate(
            [lax.dot_general(qh_b, t3[:, g * oh:(g + 1) * oh, :], dn,
                             preferred_element_type=jnp.float32)
             for g in range(nh)],
            axis=1)

    o_ref[...] = u.reshape(bt, c, th, tw).astype(o_ref.dtype)


def dct2_forward(x, block_size: int = 4, *, h_tile_target: int = 256,
                 w_tile_target: int = 1024):
    """Pallas implementation of DCT2.forward for NCHW input."""
    x = x.astype(jnp.float32)
    n, c, h, w = x.shape
    bs = block_size
    assert h % bs == 0 and w % bs == 0, "H and W must be multiples of block_size"

    op_cap, step_bytes_target, vmem_limit = _tpu_policy()

    # Spatial tiles: wide lane-aligned W tiles (DMA row contiguity), modest H tiles.
    th = _choose_spatial_tile(h, bs, h_tile_target, hw_align=8)
    tw = _choose_spatial_tile(w, bs, w_tile_target, hw_align=128)

    # Operator chunk sizes, decoupled from the spatial tile and MXU-capped.
    oh = _choose_op_chunk(th, bs, op_cap, align=8)
    ow = _choose_op_chunk(tw, bs, op_cap, align=128)

    q = make_dct_matrix(bs)
    qwt = jnp.kron(jnp.eye(ow // bs, dtype=jnp.float32), q).T   # (ow, ow), right op
    qh = jnp.kron(jnp.eye(oh // bs, dtype=jnp.float32), q)      # (oh, oh), left op

    # Batch tile: amortize per-step overhead but keep the grid >= 2 steps so
    # both v7x TensorCores get work.
    spatial_steps = (h // th) * (w // tw)
    max_bt = n if spatial_steps >= 2 else max(1, n // 2)
    bt = _choose_batch_tile(n, c * th * tw * 4, step_bytes_target, max_bt)

    rgb = (c == 3)
    kernel = functools.partial(_dct2_kernel, rgb=rgb)
    grid = (n // bt, h // th, w // tw)

    elems = n * c * h * w
    cost = pl.CostEstimate(
        flops=2 * elems * (oh + ow),
        transcendentals=0,
        bytes_accessed=2 * elems * 4 + (oh * oh + ow * ow) * 4,
    )

    return pl.pallas_call(
        kernel,
        out_shape=jax.ShapeDtypeStruct((n, c, h, w), jnp.float32),
        grid_spec=pltpu.PrefetchScalarGridSpec(
            num_scalar_prefetch=0,
            grid=grid,
            in_specs=[
                pl.BlockSpec((bt, c, th, tw), lambda b, i, j: (b, 0, i, j)),
                pl.BlockSpec((ow, ow), lambda b, i, j: (0, 0)),
                pl.BlockSpec((oh, oh), lambda b, i, j: (0, 0)),
            ],
            out_specs=pl.BlockSpec((bt, c, th, tw), lambda b, i, j: (b, 0, i, j)),
        ),
        compiler_params=pltpu.CompilerParams(
            dimension_semantics=("parallel", "parallel", "parallel"),
            vmem_limit_bytes=int(vmem_limit),
        ),
        cost_estimate=cost,
    )(x, qwt, qh)


def _reference(x, block_size: int = 4):
    """Pure-JAX reference mirroring the PyTorch module exactly."""
    x = x.astype(jnp.float32)
    n, c, h, w = x.shape
    if c == 3:
        xi = x * 255.0
        y0 = xi[:, 0] * 0.299 + xi[:, 1] * 0.587 + xi[:, 2] * 0.114
        y1 = xi[:, 0] * -0.168736 - xi[:, 1] * 0.331264 + xi[:, 2] * 0.5 + 128.0
        y2 = xi[:, 0] * 0.5 - xi[:, 1] * 0.418688 - xi[:, 2] * 0.081312 + 128.0
        x = jnp.stack([y0, y1, y2], axis=1) / 255.0
    q = make_dct_matrix(block_size)
    bs = block_size
    xb = x.reshape(n, c, h // bs, bs, w // bs, bs)
    out = jnp.einsum("ab,ncibjd,ed->nciaje", q, xb, q)
    return out.reshape(n, c, h, w)


if __name__ == "__main__":
    key = jax.random.PRNGKey(0)
    k1, k2, k3 = jax.random.split(key, 3)

    # RGB path (channels == 3): rgb_to_ycbcr + blockwise DCT.
    x_rgb = jax.random.uniform(k1, (2, 3, 16, 16), dtype=jnp.float32)
    out_rgb = jax.block_until_ready(dct2_forward(x_rgb, block_size=4))
    ref_rgb = jax.block_until_ready(_reference(x_rgb, block_size=4))

    # Generic path (channels != 3): blockwise DCT only.
    x_gen = jax.random.uniform(k2, (2, 4, 16, 16), dtype=jnp.float32)
    out_gen = jax.block_until_ready(dct2_forward(x_gen, block_size=4))
    ref_gen = jax.block_until_ready(_reference(x_gen, block_size=4))

    # Wider image: exercises the lane-chunked (operator-decoupled) W pass.
    x_wide = jax.random.uniform(k3, (1, 1, 16, 512), dtype=jnp.float32)
    out_wide = jax.block_until_ready(dct2_forward(x_wide, block_size=4))
    ref_wide = jax.block_until_ready(_reference(x_wide, block_size=4))

    assert out_rgb.shape == x_rgb.shape and out_gen.shape == x_gen.shape
    assert jnp.allclose(out_rgb, ref_rgb, atol=1e-4, rtol=1e-4)
    assert jnp.allclose(out_gen, ref_gen, atol=1e-4, rtol=1e-4)
    assert jnp.allclose(out_wide, ref_wide, atol=1e-4, rtol=1e-4)

    print("KERNEL_OK")
</pallas_src>

<mosaic_0001>
module attributes {stable_mosaic.version = 11 : i64} {
  func.func @_dct2_kernel(%arg0: i32, %arg1: i32, %arg2: i32, %arg3: memref<1x3x16x16xf32, #tpu.memory_space<vmem>>, %arg4: memref<16x16xf32, #tpu.memory_space<vmem>>, %arg5: memref<16x16xf32, #tpu.memory_space<vmem>>, %arg6: memref<1x3x16x16xf32, #tpu.memory_space<vmem>>) attributes {dimension_semantics = [#tpu.dimension_semantics<parallel>, #tpu.dimension_semantics<parallel>, #tpu.dimension_semantics<parallel>], iteration_bounds = array<i64: 2, 1, 1>, scalar_prefetch = 0 : i64, scratch_operands = 0 : i64, tpu.core_type = #tpu.core_type<tc>, window_params = [{transform_indices = @transform_0, window_bounds = array<i64: 1, 3, 16, 16>}, {pipeline_mode = #tpu.pipeline_mode<synchronous>, transform_indices = @transform_1, window_bounds = array<i64: 16, 16>}, {pipeline_mode = #tpu.pipeline_mode<synchronous>, transform_indices = @transform_2, window_bounds = array<i64: 16, 16>}, {transform_indices = @transform_3, window_bounds = array<i64: 1, 3, 16, 16>}]} {
    %c0 = arith.constant 0 : index
    %c0_0 = arith.constant 0 : index
    %c0_1 = arith.constant 0 : index
    %c0_2 = arith.constant 0 : index
    %0 = vector.load %arg3[%c0, %c0_0, %c0_1, %c0_2] : memref<1x3x16x16xf32, #tpu.memory_space<vmem>>, vector<1x3x16x16xf32>
    %1 = vector.extract_strided_slice %0 {offsets = [0, 0, 0, 0], sizes = [1, 1, 16, 16], strides = [1, 1, 1, 1]} : vector<1x3x16x16xf32> to vector<1x1x16x16xf32>
    %2 = vector.shape_cast %1 : vector<1x1x16x16xf32> to vector<1x16x16xf32>
    %3 = vector.extract_strided_slice %0 {offsets = [0, 1, 0, 0], sizes = [1, 1, 16, 16], strides = [1, 1, 1, 1]} : vector<1x3x16x16xf32> to vector<1x1x16x16xf32>
    %4 = vector.shape_cast %3 : vector<1x1x16x16xf32> to vector<1x16x16xf32>
    %5 = vector.extract_strided_slice %0 {offsets = [0, 2, 0, 0], sizes = [1, 1, 16, 16], strides = [1, 1, 1, 1]} : vector<1x3x16x16xf32> to vector<1x1x16x16xf32>
    %6 = vector.shape_cast %5 : vector<1x1x16x16xf32> to vector<1x16x16xf32>
    %cst = arith.constant 2.990000e-01 : f32
    %7 = vector.broadcast %cst : f32 to vector<1x16x16xf32>
    %8 = arith.mulf %7, %2 : vector<1x16x16xf32>
    %cst_3 = arith.constant 5.870000e-01 : f32
    %9 = vector.broadcast %cst_3 : f32 to vector<1x16x16xf32>
    %10 = arith.mulf %9, %4 : vector<1x16x16xf32>
    %11 = arith.addf %8, %10 : vector<1x16x16xf32>
    %cst_4 = arith.constant 1.140000e-01 : f32
    %12 = vector.broadcast %cst_4 : f32 to vector<1x16x16xf32>
    %13 = arith.mulf %12, %6 : vector<1x16x16xf32>
    %14 = arith.addf %11, %13 : vector<1x16x16xf32>
    %cst_5 = arith.constant -1.687360e-01 : f32
    %15 = vector.broadcast %cst_5 : f32 to vector<1x16x16xf32>
    %16 = arith.mulf %15, %2 : vector<1x16x16xf32>
    %cst_6 = arith.constant 3.312640e-01 : f32
    %17 = vector.broadcast %cst_6 : f32 to vector<1x16x16xf32>
    %18 = arith.mulf %17, %4 : vector<1x16x16xf32>
    %19 = arith.subf %16, %18 : vector<1x16x16xf32>
    %cst_7 = arith.constant 5.000000e-01 : f32
    %20 = vector.broadcast %cst_7 : f32 to vector<1x16x16xf32>
    %21 = arith.mulf %20, %6 : vector<1x16x16xf32>
    %22 = arith.addf %19, %21 : vector<1x16x16xf32>
    %cst_8 = arith.constant 0.501960814 : f32
    %23 = vector.broadcast %cst_8 : f32 to vector<1x16x16xf32>
    %24 = arith.addf %22, %23 : vector<1x16x16xf32>
    %cst_9 = arith.constant 5.000000e-01 : f32
    %25 = vector.broadcast %cst_9 : f32 to vector<1x16x16xf32>
    %26 = arith.mulf %25, %2 : vector<1x16x16xf32>
    %cst_10 = arith.constant 4.186880e-01 : f32
    %27 = vector.broadcast %cst_10 : f32 to vector<1x16x16xf32>
    %28 = arith.mulf %27, %4 : vector<1x16x16xf32>
    %29 = arith.subf %26, %28 : vector<1x16x16xf32>
    %cst_11 = arith.constant 8.131200e-02 : f32
    %30 = vector.broadcast %cst_11 : f32 to vector<1x16x16xf32>
    %31 = arith.mulf %30, %6 : vector<1x16x16xf32>
    %32 = arith.subf %29, %31 : vector<1x16x16xf32>
    %cst_12 = arith.constant 0.501960814 : f32
    %33 = vector.broadcast %cst_12 : f32 to vector<1x16x16xf32>
    %34 = arith.addf %32, %33 : vector<1x16x16xf32>
    %35 = vector.shape_cast %14 : vector<1x16x16xf32> to vector<1x1x16x16xf32>
    %36 = vector.shape_cast %24 : vector<1x16x16xf32> to vector<1x1x16x16xf32>
    %37 = vector.shape_cast %34 : vector<1x16x16xf32> to vector<1x1x16x16xf32>
    %38 = tpu.concatenate %35, %36, %37 in 1 : vector<1x1x16x16xf32>, vector<1x1x16x16xf32>, vector<1x1x16x16xf32> -> vector<1x3x16x16xf32>
    %c0_13 = arith.constant 0 : index
    %c0_14 = arith.constant 0 : index
    %39 = vector.load %arg4[%c0_13, %c0_14] : memref<16x16xf32, #tpu.memory_space<vmem>>, vector<16x16xf32>
    %c0_15 = arith.constant 0 : index
    %c0_16 = arith.constant 0 : index
    %40 = vector.load %arg5[%c0_15, %c0_16] : memref<16x16xf32, #tpu.memory_space<vmem>>, vector<16x16xf32>
    %41 = vector.shape_cast %38 : vector<1x3x16x16xf32> to vector<48x16xf32>
    %cst_17 = arith.constant dense<0.000000e+00> : vector<48x16xf32>
    %42 = tpu.matmul %41, %39, %cst_17 {dimension_numbers = #tpu.dot_dimension_numbers<[1], [0], [0], [1], [0, 0, 1, 1], [], []>} : vector<48x16xf32>, vector<16x16xf32>, vector<48x16xf32> -> vector<48x16xf32>
    %43 = vector.shape_cast %42 : vector<48x16xf32> to vector<3x16x16xf32>
    %44 = vector.shape_cast %40 : vector<16x16xf32> to vector<1x16x16xf32>
    %45 = vector.broadcast %44 : vector<1x16x16xf32> to vector<3x16x16xf32>
    %cst_18 = arith.constant dense<0.000000e+00> : vector<3x16x16xf32>
    %46 = tpu.matmul %45, %43, %cst_18 {dimension_numbers = #tpu.dot_dimension_numbers<[2], [1], [1], [2], [0, 0, 0, 1, 1, 2], [0], [0]>} : vector<3x16x16xf32>, vector<3x16x16xf32>, vector<3x16x16xf32> -> vector<3x16x16xf32>
    %47 = vector.shape_cast %46 : vector<3x16x16xf32> to vector<1x3x16x16xf32>
    %c0_19 = arith.constant 0 : index
    %c0_20 = arith.constant 0 : index
    %c0_21 = arith.constant 0 : index
    %c0_22 = arith.constant 0 : index
    %48 = vector.load %arg6[%c0_19, %c0_20, %c0_21, %c0_22] : memref<1x3x16x16xf32, #tpu.memory_space<vmem>>, vector<1x3x16x16xf32>
    tpu.vector_store %arg6[%c0_19, %c0_20, %c0_21, %c0_22], %47 {strides = array<i32>} : memref<1x3x16x16xf32, #tpu.memory_space<vmem>>, vector<1x3x16x16xf32>,
    return
  }
  func.func @transform_0(%arg0: i32, %arg1: i32, %arg2: i32) -> (i32, i32, i32, i32) {
    %c0_i32 = arith.constant 0 : i32
    %c0_i32_0 = arith.constant 0 : i32
    return %arg0, %c0_i32, %arg1, %arg2 : i32, i32, i32, i32
  }
  func.func @transform_1(%arg0: i32, %arg1: i32, %arg2: i32) -> (i32, i32) {
    %c0_i32 = arith.constant 0 : i32
    %c0_i32_0 = arith.constant 0 : i32
    %c0_i32_1 = arith.constant 0 : i32
    return %c0_i32, %c0_i32_0 : i32, i32
  }
  func.func @transform_2(%arg0: i32, %arg1: i32, %arg2: i32) -> (i32, i32) {
    %c0_i32 = arith.constant 0 : i32
    %c0_i32_0 = arith.constant 0 : i32
    %c0_i32_1 = arith.constant 0 : i32
    return %c0_i32, %c0_i32_0 : i32, i32
  }
  func.func @transform_3(%arg0: i32, %arg1: i32, %arg2: i32) -> (i32, i32, i32, i32) {
    %c0_i32 = arith.constant 0 : i32
    %c0_i32_0 = arith.constant 0 : i32
    return %arg0, %c0_i32, %arg1, %arg2 : i32, i32, i32, i32
  }
}

</mosaic_0001>

<llo_original>
// kernel: tpu_custom_call.1
$region0: #{tpu_custom_call.1}
  #allocation0 [shape = 'u32[]', space=smem, size = 0x4, offset = 0x4, fixed_abs, tag = 'smem constant byte address 0x4 - core index']
  #allocation1 [shape = 'u32[144,128]{1,0:T(1,128)}', space=vmem, size = 0x12000, scoped, tag = 'internal scratch']
  %s0 = inlined_call_operand.hbm [shape: f32[2,3,16,16], index: 0, kind: input, shape index: {}]
  %s1 = inlined_call_operand.hbm [shape: f32[16,16], index: 1, kind: input, shape index: {}]
  %s2 = inlined_call_operand.hbm [shape: f32[16,16], index: 2, kind: input, shape index: {}]
  %s3 = inlined_call_operand.hbm [shape: f32[2,3,16,16], index: 3, kind: output, shape index: {}]
  %s4 = sld [smem:[#allocation0]]
  $region57: #{tpu_custom_call.1} parent=0
    _
  %s6 = ssub.s32 1, %s4
  %s7 = scalar_select 0, %s6, %s4
  $region1: #{tpu_custom_call.1} parent=0
    #allocation2 [shape = 'u8[49152]{0}', space=vmem, size = 0xc000, scoped, tag = 'input window, operand 0']
    #allocation3 [shape = 's32[2]{0}', space=sflag, size = 0x8, scoped, tag = 'scoped memory for tpu_custom_call.1']
    #allocation4 [shape = 's32[2]{0}', space=sflag, size = 0x8, scoped, tag = 'scoped memory for tpu_custom_call.1']
    #allocation5 [shape = 'u8[8192]{0}', space=vmem, size = 0x2000, scoped, tag = 'input window, operand 1, single buffered']
    #allocation6 [shape = 's32[1]{0}', space=sflag, size = 0x4, scoped, tag = 'scoped memory for tpu_custom_call.1']
    #allocation7 [shape = 'u8[8192]{0}', space=vmem, size = 0x2000, scoped, tag = 'input window, operand 2, single buffered']
    #allocation8 [shape = 'u8[49152]{0}', space=vmem, size = 0xc000, scoped, tag = 'output window, operand 0']
    %8 = vsyncpa [#allocation3], 0
    %s9 = scalar_lea.sflag [#allocation3], 1
    %10 = vsyncpa %s9, 0
    %11 = vsyncpa [#allocation6], 0
    %12 = vsyncpa [#allocation4], 0
    %s13 = scalar_lea.sflag [#allocation4], 1
    %14 = vsyncpa %s13, 0
    loop: start=0, step=1, limit=4
    $region2: #{tpu_custom_call.1} parent=1 // loop_pre_header
      _
    $region3: #{tpu_custom_call.1} parent=1 // loop_header
      %s16 = sphi 0, %s20
      %p17 = scmp.ge.s32.totalorder %s16, 4
      %s23 = sphi 0, %s42
      %s24 = sphi 0, %s38
      %s25 = sphi 0, %s34
      %s26 = sphi 0, %s23
      %s27 = sphi 0, %s24
      %s28 = sphi 0, %s25
      %s29 = sphi 0, %s26
      %s30 = sphi 0, %s27
      %s31 = sphi 0, %s28
      %s49 = sphi 0, %s51
      %s52 = sphi 0, %s49
      %s53 = sphi 0, %s52
      %s69 = sphi 0, %s53
      %s73 = sphi 0, %s73
      %s75 = sphi 0, %s73
      %s76 = sphi 0, %s75
      %s90 = sphi 0, %s76
      %s94 = sphi 0, %s94
      %s96 = sphi 0, %s94
      %s97 = sphi 0, %s96
      %s111 = sphi 0, %s97
      %s121 = sphi 0, %s123
      %s124 = sphi 0, %s121
      %s125 = sphi 0, %s124
      %s141 = sphi 0, %s125
    $region4: #{tpu_custom_call.1} parent=1 // loop_header_branch
      %19 = sbr.rel (%p17) target = $region8
    $region5: #{tpu_custom_call.1} parent=1 // loop_body
      %s21 = ssub.s32 %s16, 1
      %s22 = ssub.s32 %s16, 2
      %s32 = sadd.s32 1, %s25
      %p33 = scmp.ge.s32.totalorder %s32, 1
      %s34 = scalar_select %p33, 0, %s32
      %s35 = sadd.s32 1, %s24
      %s36 = scalar_select %p33, %s35, %s24
      %p37 = scmp.ge.s32.totalorder %s36, 1
      %s38 = scalar_select %p37, 0, %s36
      %s39 = sadd.s32 1, %s23
      %s40 = scalar_select %p37, %s39, %s23
      %p41 = scmp.ge.s32.totalorder %s40, 2
      %s42 = scalar_select %p41, 0, %s40
      %s43 = ssub.s32 %s23, %s42
      %s44 = ssub.s32 %s24, %s38
      %s45 = sor.u32 %s43, %s44
      %s46 = ssub.s32 %s25, %s34
      %s47 = sor.u32 %s45, %s46
      %p48 = scmp.eq.s32.totalorder %s47, 0
      %s50 = sadd.s32 %s49, 1
      %s51 = scalar_select %p48, %s49, %s50
      %p54 = pneg %p48
      %p55 = scmp.eq.s32.totalorder %s16, 1
      %p56 = por %p54, %p55
      %p57 = scmp.ne.s32.totalorder %s49, %s52
      %p58 = scmp.eq.s32.totalorder %s16, 0
      %p59 = por %p57, %p58
      %p60 = scmp.ne.s32.totalorder %s49, %s52
      %p61 = scmp.eq.s32.totalorder %s21, 1
      %p62 = por %p60, %p61
      %p63 = scmp.ne.s32.totalorder %s52, %s53
      %p64 = scmp.eq.s32.totalorder %s21, 0
      %p65 = por %p63, %p64
      %p66 = scmp.ne.s32.totalorder %s52, %s53
      %p67 = scmp.eq.s32.totalorder %s22, 1
      %p68 = por %p66, %p67
      %p70 = scmp.ne.s32.totalorder %s53, %s69
      %p71 = scmp.eq.s32.totalorder %s22, 0
      %p72 = por %p70, %p71
      %s74 = sadd.s32 %s73, 1
      %p77 = scmp.eq.s32.totalorder %s16, 1
      %p78 = scmp.ne.s32.totalorder %s73, %s75
      %p79 = scmp.eq.s32.totalorder %s16, 0
      %p80 = por %p78, %p79
      %p81 = scmp.ne.s32.totalorder %s73, %s75
      %p82 = scmp.eq.s32.totalorder %s21, 1
      %p83 = por %p81, %p82
      %p84 = scmp.ne.s32.totalorder %s75, %s76
      %p85 = scmp.eq.s32.totalorder %s21, 0
      %p86 = por %p84, %p85
      %p87 = scmp.ne.s32.totalorder %s75, %s76
      %p88 = scmp.eq.s32.totalorder %s22, 1
      %p89 = por %p87, %p88
      %p91 = scmp.ne.s32.totalorder %s76, %s90
      %p92 = scmp.eq.s32.totalorder %s22, 0
      %p93 = por %p91, %p92
      %s95 = sadd.s32 %s94, 1
      %p98 = scmp.eq.s32.totalorder %s16, 1
      %p99 = scmp.ne.s32.totalorder %s94, %s96
      %p100 = scmp.eq.s32.totalorder %s16, 0
      %p101 = por %p99, %p100
      %p102 = scmp.ne.s32.totalorder %s94, %s96
      %p103 = scmp.eq.s32.totalorder %s21, 1
      %p104 = por %p102, %p103
      %p105 = scmp.ne.s32.totalorder %s96, %s97
      %p106 = scmp.eq.s32.totalorder %s21, 0
      %p107 = por %p105, %p106
      %p108 = scmp.ne.s32.totalorder %s96, %s97
      %p109 = scmp.eq.s32.totalorder %s22, 1
      %p110 = por %p108, %p109
      %p112 = scmp.ne.s32.totalorder %s97, %s111
      %p113 = scmp.eq.s32.totalorder %s22, 0
      %p114 = por %p112, %p113
      %s115 = ssub.s32 %s23, %s42
      %s116 = ssub.s32 %s24, %s38
      %s117 = sor.u32 %s115, %s116
      %s118 = ssub.s32 %s25, %s34
      %s119 = sor.u32 %s117, %s118
      %p120 = scmp.eq.s32.totalorder %s119, 0
      %s122 = sadd.s32 %s121, 1
      %s123 = scalar_select %p120, %s121, %s122
      %p126 = pneg %p120
      %p127 = scmp.eq.s32.totalorder %s16, 1
      %p128 = por %p126, %p127
      %p129 = scmp.ne.s32.totalorder %s121, %s124
      %p130 = scmp.eq.s32.totalorder %s16, 0
      %p131 = por %p129, %p130
      %p132 = scmp.ne.s32.totalorder %s121, %s124
      %p133 = scmp.eq.s32.totalorder %s21, 1
      %p134 = por %p132, %p133
      %p135 = scmp.ne.s32.totalorder %s124, %s125
      %p136 = scmp.eq.s32.totalorder %s21, 0
      %p137 = por %p135, %p136
      %p138 = scmp.ne.s32.totalorder %s124, %s125
      %p139 = scmp.eq.s32.totalorder %s22, 1
      %p140 = por %p138, %p139
      %p142 = scmp.ne.s32.totalorder %s125, %s141
      %p143 = scmp.eq.s32.totalorder %s22, 0
      %p144 = por %p142, %p143
      %p145 = scmp.le.s32.totalorder 1, %s16
      %p146 = scmp.lt.s32.totalorder %s16, 3
      %p147 = pnand %p145, %p146
      %p148 = pneg %p147
      // Predicated region
      $region9: #{tpu_custom_call.1} parent=5 // pred_check
        _
      $region10: #{tpu_custom_call.1} parent=5 // pred_check_branch
        %150 = sbr.rel (%p147) target = $region12
      $region11: #{tpu_custom_call.1} parent=5 // pred_region
        %s151 = ssub.s32 %s16, 1
        // Predicated region
        $region13: #{tpu_custom_call.1} parent=11 // pred_check
          %p152 = pneg %p86
        $region14: #{tpu_custom_call.1} parent=11 // pred_check_branch
          %154 = sbr.rel (%p152) target = $region16
        $region15: #{tpu_custom_call.1} parent=11 // pred_region
          %s156 = ssub.s32 256, 256
          %157 = vsyncadd [#allocation6], %s156
          %s158 = sshll.u32 [#allocation5], 4
          %s159 = int_to_ptr.vmem [resolvable:$true] %s158
          %164 = dma.hbm_to_vmem [thread:$0]  %s1, 256, %s159, [#allocation6], 128, 128, 8
        $region16: #{tpu_custom_call.1} parent=11 // pred_fallthru
          _
        // Predicated region
        $region17: #{tpu_custom_call.1} parent=11 // pred_check
          %p165 = pneg %p107
        $region18: #{tpu_custom_call.1} parent=11 // pred_check_branch
          %167 = sbr.rel (%p165) target = $region20
        $region19: #{tpu_custom_call.1} parent=11 // pred_region
          %s169 = ssub.s32 256, 256
          %170 = vsyncadd [#allocation6], %s169
          %s171 = sshll.u32 [#allocation7], 4
          %s172 = int_to_ptr.vmem [resolvable:$true] %s171
          %177 = dma.hbm_to_vmem [thread:$0]  %s2, 256, %s172, [#allocation6], 128, 128, 8
        $region20: #{tpu_custom_call.1} parent=11 // pred_fallthru
          _
      $region12: #{tpu_custom_call.1} parent=5 // pred_fallthru
        _
      %p178 = scmp.lt.s32.totalorder %s16, 2
      // Predicated region
      $region21: #{tpu_custom_call.1} parent=5 // pred_check
        %p179 = pneg %p178
      $region22: #{tpu_custom_call.1} parent=5 // pred_check_branch
        %181 = sbr.rel (%p179) target = $region24
      $region23: #{tpu_custom_call.1} parent=5 // pred_region
        // Predicated region
        $region25: #{tpu_custom_call.1} parent=23 // pred_check
          %p182 = pneg %p59
        $region26: #{tpu_custom_call.1} parent=23 // pred_check_branch
          %184 = sbr.rel (%p182) target = $region28
        $region27: #{tpu_custom_call.1} parent=23 // pred_region
          %s185 = sand.u32 %s49, 1
          %s186 = scalar_lea.sflag [#allocation3], %s185
          %s187 = sand.u32 %s49, 1
          %s188 = smul.addr %s187, 48
          %s189 = scalar_lea.vmem [#allocation2], %s188
          %s190 = smul.u32 2, %s24
          %s192 = ssub.s32 768, 768
          %193 = vsyncadd %s186, %s192
          %s194 = sadd.s32 %s25, %s190
          %s195 = smul.addr %s23, 6
          %s196 = sadd.s32 %s194, %s195
          %s197 = smul.addr %s196, 128
          %s198 = scalar_lea.hbm %s0, %s197
          %s199 = sshll.u32 %s189, 4
          %s200 = int_to_ptr.vmem [resolvable:$true] %s199
          %205 = dma.hbm_to_vmem [thread:$0]  %s198, 768, %s200, %s186, 128, 128, 8
        $region28: #{tpu_custom_call.1} parent=23 // pred_fallthru
          _
      $region24: #{tpu_custom_call.1} parent=5 // pred_fallthru
        _
      %p206 = scmp.le.s32.totalorder 1, %s16
      %p207 = scmp.lt.s32.totalorder %s16, 3
      %p208 = pnand %p206, %p207
      %p209 = pneg %p208
      // Predicated region
      $region29: #{tpu_custom_call.1} parent=5 // pred_check
        _
      $region30: #{tpu_custom_call.1} parent=5 // pred_check_branch
        %211 = sbr.rel (%p208) target = $region32
      $region31: #{tpu_custom_call.1} parent=5 // pred_region
        %s212 = ssub.s32 %s16, 1
        %s213 = sand.u32 %s52, 1
        %s214 = scalar_lea.sflag [#allocation3], %s213
        %s215 = sand.u32 %s52, 1
        %s216 = smul.addr %s215, 48
        %s217 = scalar_lea.vmem [#allocation2], %s216
        // Predicated region
        $region33: #{tpu_custom_call.1} parent=31 // pred_check
          %p218 = pneg %p65
        $region34: #{tpu_custom_call.1} parent=31 // pred_check_branch
          %220 = sbr.rel (%p218) target = $region36
        $region35: #{tpu_custom_call.1} parent=31 // pred_region
          %221 = dma.done %s214, 768
        $region36: #{tpu_custom_call.1} parent=31 // pred_fallthru
          _
        // Predicated region
        $region37: #{tpu_custom_call.1} parent=31 // pred_check
          %p222 = pneg %p86
        $region38: #{tpu_custom_call.1} parent=31 // pred_check_branch
          %224 = sbr.rel (%p222) target = $region40
        $region39: #{tpu_custom_call.1} parent=31 // pred_region
          %225 = dma.done [#allocation6], 256
        $region40: #{tpu_custom_call.1} parent=31 // pred_fallthru
          _
        // Predicated region
        $region41: #{tpu_custom_call.1} parent=31 // pred_check
          %p226 = pneg %p107
        $region42: #{tpu_custom_call.1} parent=31 // pred_check_branch
          %228 = sbr.rel (%p226) target = $region44
        $region43: #{tpu_custom_call.1} parent=31 // pred_region
          %229 = dma.done [#allocation6], 256
        $region44: #{tpu_custom_call.1} parent=31 // pred_fallthru
          _
        %s230 = sand.u32 %s52, 1
        %s231 = scalar_lea.sflag [#allocation3], %s230
        %s232 = sand.u32 %s52, 1
        %s233 = smul.addr %s232, 48
        %s234 = scalar_lea.vmem [#allocation2], %s233
        %p235 = pneg %p65
        %p236 = pneg %p62
        %p237 = pneg %p86
        %p238 = pneg %p83
        %p239 = pneg %p107
        %p240 = pneg %p104
        %p241 = pneg %p137
        %p242 = pneg %p134
        %s243 = sand.u32 %s124, 1
        %s244 = scalar_lea.sflag [#allocation4], %s243
        %s245 = sand.u32 %s124, 1
        %s246 = smul.addr %s245, 48
        %s247 = scalar_lea.vmem [#allocation8], %s246
        %s248 = smul.u32 2, %s27
        %s249 = smul.u32 2, %s27
        %v250 = vld [vmem:[%s217] sm:$0xff]
        %v251 = vld [vmem:[%s217 + $0x8] sm:$0xff]
        %v252 = vld [vmem:[%s217 + $0x10] sm:$0xff]
        %v253 = vld [vmem:[%s217 + $0x18] sm:$0xff]
        %v254 = vld [vmem:[%s217 + $0x20] sm:$0xff]
        %v255 = vld [vmem:[%s217 + $0x28] sm:$0xff]
        %v256 = vmul.f32 %v250, 0.299
        %v257 = vmul.f32 %v251, 0.299
        %v258 = vmul.f32 %v252, 0.587
        %v259 = vmul.f32 %v253, 0.587
        %v260 = vadd.f32 %v256, %v258
        %v261 = vadd.f32 %v257, %v259
        %v262 = vmul.f32 %v254, 0.114
        %v263 = vmul.f32 %v255, 0.114
        %v264 = vadd.f32 %v260, %v262
        %v265 = vadd.f32 %v261, %v263
        %v266 = vmul.f32 %v250, -0.168736
        %v267 = vmul.f32 %v251, -0.168736
        %v268 = vmul.f32 %v252, 0.331264
        %v269 = vmul.f32 %v253, 0.331264
        %v270 = vsub.f32 %v266, %v268
        %v271 = vsub.f32 %v267, %v269
        %v272 = vmul.f32 %v254, 0.5
        %v273 = vmul.f32 %v255, 0.5
        %v274 = vadd.f32 %v270, %v272
        %v275 = vadd.f32 %v271, %v273
        %v276 = vadd.f32 %v274, 0.5019608
        %v277 = vadd.f32 %v275, 0.5019608
        %v278 = vmul.f32 %v250, 0.5
        %v279 = vmul.f32 %v251, 0.5
        %v280 = vmul.f32 %v252, 0.418688
        %v281 = vmul.f32 %v253, 0.418688
        %v282 = vsub.f32 %v278, %v280
        %v283 = vsub.f32 %v279, %v281
        %v284 = vmul.f32 %v254, 0.081312
        %v285 = vmul.f32 %v255, 0.081312
        %v286 = vsub.f32 %v282, %v284
        %v287 = vsub.f32 %v283, %v285
        %v288 = vadd.f32 %v286, 0.5019608
        %v289 = vadd.f32 %v287, 0.5019608
        %v290 = vld [vmem:[#allocation5] sm:$0xff]
        %v291 = vld [vmem:[#allocation5 + $0x8] sm:$0xff]
        %v292 = vld [vmem:[#allocation7] sm:$0xff]
        %v293 = vld [vmem:[#allocation7 + $0x8] sm:$0xff]
        %vm294 = vcmask 130048
        %v296 = vsel %vm294, %v264, 0
        %v299 = vsel %vm294, %v265, 0
        %v302 = vsel %vm294, %v276, 0
        %v305 = vsel %vm294, %v277, 0
        %v308 = vsel %vm294, %v288, 0
        %v311 = vsel %vm294, %v289, 0
        %313 = vmatprep.subr.mxu0 0.0
        %314 = vmatpush1.msra.mxu0 %v290
        %315 = vmatprep.subr.mxu0 0.0
        %316 = vmatpush1.msra.mxu0 %v291
        %317 = vmatprep.subr.mxu0 0.0
        %318 = vmatpush1.msra.mxu0 0.0
        %319 = vmatprep.subr.mxu0 0.0
        %320 = vmatpush1.msra.mxu0 0.0
        %321 = vmatprep.subr.mxu0 0.0
        %322 = vmatpush1.msra.mxu0 0.0
        %323 = vmatprep.subr.mxu0 0.0
        %324 = vmatpush1.msra.mxu0 0.0
        %325 = vmatprep.subr.mxu0 0.0
        %326 = vmatpush1.msra.mxu0 0.0
        %327 = vmatprep.subr.mxu0 0.0
        %328 = vmatpush1.msra.mxu0 0.0
        %329 = vmatprep.subr.mxu0 0.0
        %330 = vmatpush1.msra.mxu0 0.0
        %331 = vmatprep.subr.mxu0 0.0
        %332 = vmatpush1.msra.mxu0 0.0
        %333 = vmatprep.subr.mxu0 0.0
        %334 = vmatpush1.msra.mxu0 0.0
        %335 = vmatprep.subr.mxu0 0.0
        %336 = vmatpush1.msra.mxu0 0.0
        %337 = vmatprep.subr.mxu0 0.0
        %338 = vmatpush1.msra.mxu0 0.0
        %339 = vmatprep.subr.mxu0 0.0
        %340 = vmatpush1.msra.mxu0 0.0
        %341 = vmatprep.subr.mxu0 0.0
        %342 = vmatpush1.msra.mxu0 0.0
        %343 = vmatprep.subr.mxu0 0.0
        %344 = vmatpush1.msra.mxu0 0.0
        %345 = vmatprep.subr.mxu0 0.0
        %346 = vmatpush1.msra.mxu0 0.0
        %347 = vmatprep.subr.mxu0 0.0
        %348 = vmatpush1.msra.mxu0 0.0
        %349 = vmatprep.subr.mxu0 0.0
        %350 = vmatpush1.msra.mxu0 0.0
        %351 = vmatprep.subr.mxu0 0.0
        %352 = vmatpush1.msra.mxu0 0.0
        %353 = vmatprep.subr.mxu0 0.0
        %354 = vmatpush1.msra.mxu0 0.0
        %355 = vmatprep.subr.mxu0 0.0
        %356 = vmatpush1.msra.mxu0 0.0
        %357 = vmatprep.subr.mxu0 0.0
        %358 = vmatpush1.msra.mxu0 0.0
        %359 = vmatprep.subr.mxu0 0.0
        %360 = vmatpush1.msra.mxu0 0.0
        %361 = vmatprep.subr.mxu0 0.0
        %362 = vmatpush1.msra.mxu0 0.0
        %363 = vmatprep.subr.mxu0 0.0
        %364 = vmatpush1.msra.mxu0 0.0
        %365 = vmatprep.subr.mxu0 0.0
        %366 = vmatpush1.msra.mxu0 0.0
        %367 = vmatprep.subr.mxu0 0.0
        %368 = vmatpush1.msra.mxu0 0.0
        %369 = vmatprep.subr.mxu0 0.0
        %370 = vmatpush1.msra.mxu0 0.0
        %371 = vmatprep.subr.mxu0 0.0
        %372 = vmatpush1.msra.mxu0 0.0
        %373 = vmatprep.subr.mxu0 0.0
        %374 = vmatpush1.msra.mxu0 0.0
        %375 = vmatprep.subr.mxu0 0.0
        %376 = vmatpush1.msra.mxu0 0.0
        %377 = vmatprep.mubr.f32.mxu0 0.0
        %378 = vmatmul.mubr.f32.gmra.mrb[0].mxu0 %v296
        %v379 = vpop.f32.mrb[0].mxu0
        %v380 = vadd.f32 0.0, %v379
        %v381 = vpop.f32.mrb[0].mxu0
        %382 = vmatprep.mubr.f32.mxu0 0.0
        %383 = vmatmul.mubr.f32.gmra.mrb[0].mxu0 %v299
        %v384 = vpop.f32.mrb[0].mxu0
        %v385 = vadd.f32 0.0, %v384
        %v386 = vpop.f32.mrb[0].mxu0
        %387 = vmatprep.mubr.f32.mxu0 0.0
        %388 = vmatmul.mubr.f32.gmra.mrb[0].mxu0 %v302
        %v389 = vpop.f32.mrb[0].mxu0
        %v390 = vadd.f32 0.0, %v389
        %v391 = vpop.f32.mrb[0].mxu0
        %392 = vmatprep.mubr.f32.mxu0 0.0
        %393 = vmatmul.mubr.f32.gmra.mrb[0].mxu0 %v305
        %v394 = vpop.f32.mrb[0].mxu0
        %v395 = vadd.f32 0.0, %v394
        %v396 = vpop.f32.mrb[0].mxu0
        %397 = vmatprep.mubr.f32.mxu0 0.0
        %398 = vmatmul.mubr.f32.gmra.mrb[0].mxu0 %v308
        %v399 = vpop.f32.mrb[0].mxu0
        %v400 = vadd.f32 0.0, %v399
        %v401 = vpop.f32.mrb[0].mxu0
        %402 = vmatprep.mubr.f32.mxu0 0.0
        %403 = vmatmul.mubr.f32.gmra.mrb[0].mxu0 %v311
        %v404 = vpop.f32.mrb[0].mxu0
        %v405 = vadd.f32 0.0, %v404
        %v406 = vpop.f32.mrb[0].mxu0
        %407 = vdwg.mxu0
        %v409 = vsel %vm294, %v292, 0
        %v412 = vsel %vm294, %v293, 0
        %414 = vmatprep.subr.mxu0 0.0
        %415 = vmatpush1.msra.mxu0 %v380
        %416 = vmatprep.subr.mxu0 0.0
        %417 = vmatpush1.msra.mxu0 %v385
        %418 = vmatprep.subr.mxu0 0.0
        %419 = vmatpush1.msra.mxu0 0.0
        %420 = vmatprep.subr.mxu0 0.0
        %421 = vmatpush1.msra.mxu0 0.0
        %422 = vmatprep.subr.mxu0 0.0
        %423 = vmatpush1.msra.mxu0 0.0
        %424 = vmatprep.subr.mxu0 0.0
        %425 = vmatpush1.msra.mxu0 0.0
        %426 = vmatprep.subr.mxu0 0.0
        %427 = vmatpush1.msra.mxu0 0.0
        %428 = vmatprep.subr.mxu0 0.0
        %429 = vmatpush1.msra.mxu0 0.0
        %430 = vmatprep.subr.mxu0 0.0
        %431 = vmatpush1.msra.mxu0 0.0
        %432 = vmatprep.subr.mxu0 0.0
        %433 = vmatpush1.msra.mxu0 0.0
        %434 = vmatprep.subr.mxu0 0.0
        %435 = vmatpush1.msra.mxu0 0.0
        %436 = vmatprep.subr.mxu0 0.0
        %437 = vmatpush1.msra.mxu0 0.0
        %438 = vmatprep.subr.mxu0 0.0
        %439 = vmatpush1.msra.mxu0 0.0
        %440 = vmatprep.subr.mxu0 0.0
        %441 = vmatpush1.msra.mxu0 0.0
        %442 = vmatprep.subr.mxu0 0.0
        %443 = vmatpush1.msra.mxu0 0.0
        %444 = vmatprep.subr.mxu0 0.0
        %445 = vmatpush1.msra.mxu0 0.0
        %446 = vmatprep.subr.mxu0 0.0
        %447 = vmatpush1.msra.mxu0 0.0
        %448 = vmatprep.subr.mxu0 0.0
        %449 = vmatpush1.msra.mxu0 0.0
        %450 = vmatprep.subr.mxu0 0.0
        %451 = vmatpush1.msra.mxu0 0.0
        %452 = vmatprep.subr.mxu0 0.0
        %453 = vmatpush1.msra.mxu0 0.0
        %454 = vmatprep.subr.mxu0 0.0
        %455 = vmatpush1.msra.mxu0 0.0
        %456 = vmatprep.subr.mxu0 0.0
        %457 = vmatpush1.msra.mxu0 0.0
        %458 = vmatprep.subr.mxu0 0.0
        %459 = vmatpush1.msra.mxu0 0.0
        %460 = vmatprep.subr.mxu0 0.0
        %461 = vmatpush1.msra.mxu0 0.0
        %462 = vmatprep.subr.mxu0 0.0
        %463 = vmatpush1.msra.mxu0 0.0
        %464 = vmatprep.subr.mxu0 0.0
        %465 = vmatpush1.msra.mxu0 0.0
        %466 = vmatprep.subr.mxu0 0.0
        %467 = vmatpush1.msra.mxu0 0.0
        %468 = vmatprep.subr.mxu0 0.0
        %469 = vmatpush1.msra.mxu0 0.0
        %470 = vmatprep.subr.mxu0 0.0
        %471 = vmatpush1.msra.mxu0 0.0
        %472 = vmatprep.subr.mxu0 0.0
        %473 = vmatpush1.msra.mxu0 0.0
        %474 = vmatprep.subr.mxu0 0.0
        %475 = vmatpush1.msra.mxu0 0.0
        %476 = vmatprep.subr.mxu0 0.0
        %477 = vmatpush1.msra.mxu0 0.0
        %478 = vmatprep.mubr.f32.mxu0 0.0
        %479 = vmatmul.mubr.f32.gmra.mrb[0].mxu0 %v409
        %v480 = vpop.f32.mrb[0].mxu0
        %v481 = vadd.f32 0.0, %v480
        %v482 = vpop.f32.mrb[0].mxu0
        %483 = vmatprep.mubr.f32.mxu0 0.0
        %484 = vmatmul.mubr.f32.gmra.mrb[0].mxu0 %v412
        %v485 = vpop.f32.mrb[0].mxu0
        %v486 = vadd.f32 0.0, %v485
        %v487 = vpop.f32.mrb[0].mxu0
        %488 = vdwg.mxu0
        %489 = vmatprep.subr.mxu0 0.0
        %490 = vmatpush1.msra.mxu0 %v390
        %491 = vmatprep.subr.mxu0 0.0
        %492 = vmatpush1.msra.mxu0 %v395
        %493 = vmatprep.subr.mxu0 0.0
        %494 = vmatpush1.msra.mxu0 0.0
        %495 = vmatprep.subr.mxu0 0.0
        %496 = vmatpush1.msra.mxu0 0.0
        %497 = vmatprep.subr.mxu0 0.0
        %498 = vmatpush1.msra.mxu0 0.0
        %499 = vmatprep.subr.mxu0 0.0
        %500 = vmatpush1.msra.mxu0 0.0
        %501 = vmatprep.subr.mxu0 0.0
        %502 = vmatpush1.msra.mxu0 0.0
        %503 = vmatprep.subr.mxu0 0.0
        %504 = vmatpush1.msra.mxu0 0.0
        %505 = vmatprep.subr.mxu0 0.0
        %506 = vmatpush1.msra.mxu0 0.0
        %507 = vmatprep.subr.mxu0 0.0
        %508 = vmatpush1.msra.mxu0 0.0
        %509 = vmatprep.subr.mxu0 0.0
        %510 = vmatpush1.msra.mxu0 0.0
        %511 = vmatprep.subr.mxu0 0.0
        %512 = vmatpush1.msra.mxu0 0.0
        %513 = vmatprep.subr.mxu0 0.0
        %514 = vmatpush1.msra.mxu0 0.0
        %515 = vmatprep.subr.mxu0 0.0
        %516 = vmatpush1.msra.mxu0 0.0
        %517 = vmatprep.subr.mxu0 0.0
        %518 = vmatpush1.msra.mxu0 0.0
        %519 = vmatprep.subr.mxu0 0.0
        %520 = vmatpush1.msra.mxu0 0.0
        %521 = vmatprep.subr.mxu0 0.0
        %522 = vmatpush1.msra.mxu0 0.0
        %523 = vmatprep.subr.mxu0 0.0
        %524 = vmatpush1.msra.mxu0 0.0
        %525 = vmatprep.subr.mxu0 0.0
        %526 = vmatpush1.msra.mxu0 0.0
        %527 = vmatprep.subr.mxu0 0.0
        %528 = vmatpush1.msra.mxu0 0.0
        %529 = vmatprep.subr.mxu0 0.0
        %530 = vmatpush1.msra.mxu0 0.0
        %531 = vmatprep.subr.mxu0 0.0
        %532 = vmatpush1.msra.mxu0 0.0
        %533 = vmatprep.subr.mxu0 0.0
        %534 = vmatpush1.msra.mxu0 0.0
        %535 = vmatprep.subr.mxu0 0.0
        %536 = vmatpush1.msra.mxu0 0.0
        %537 = vmatprep.subr.mxu0 0.0
        %538 = vmatpush1.msra.mxu0 0.0
        %539 = vmatprep.subr.mxu0 0.0
        %540 = vmatpush1.msra.mxu0 0.0
        %541 = vmatprep.subr.mxu0 0.0
        %542 = vmatpush1.msra.mxu0 0.0
        %543 = vmatprep.subr.mxu0 0.0
        %544 = vmatpush1.msra.mxu0 0.0
        %545 = vmatprep.subr.mxu0 0.0
        %546 = vmatpush1.msra.mxu0 0.0
        %547 = vmatprep.subr.mxu0 0.0
        %548 = vmatpush1.msra.mxu0 0.0
        %549 = vmatprep.subr.mxu0 0.0
        %550 = vmatpush1.msra.mxu0 0.0
        %551 = vmatprep.subr.mxu0 0.0
        %552 = vmatpush1.msra.mxu0 0.0
        %553 = vmatprep.mubr.f32.mxu0 0.0
        %554 = vmatmul.mubr.f32.gmra.mrb[0].mxu0 %v409
        %v555 = vpop.f32.mrb[0].mxu0
        %v556 = vadd.f32 0.0, %v555
        %v557 = vpop.f32.mrb[0].mxu0
        %558 = vmatprep.mubr.f32.mxu0 0.0
        %559 = vmatmul.mubr.f32.gmra.mrb[0].mxu0 %v412
        %v560 = vpop.f32.mrb[0].mxu0
        %v561 = vadd.f32 0.0, %v560
        %v562 = vpop.f32.mrb[0].mxu0
        %563 = vdwg.mxu0
        %564 = vmatprep.subr.mxu0 0.0
        %565 = vmatpush1.msra.mxu0 %v400
        %566 = vmatprep.subr.mxu0 0.0
        %567 = vmatpush1.msra.mxu0 %v405
        %568 = vmatprep.subr.mxu0 0.0
        %569 = vmatpush1.msra.mxu0 0.0
        %570 = vmatprep.subr.mxu0 0.0
        %571 = vmatpush1.msra.mxu0 0.0
        %572 = vmatprep.subr.mxu0 0.0
        %573 = vmatpush1.msra.mxu0 0.0
        %574 = vmatprep.subr.mxu0 0.0
        %575 = vmatpush1.msra.mxu0 0.0
        %576 = vmatprep.subr.mxu0 0.0
        %577 = vmatpush1.msra.mxu0 0.0
        %578 = vmatprep.subr.mxu0 0.0
        %579 = vmatpush1.msra.mxu0 0.0
        %580 = vmatprep.subr.mxu0 0.0
        %581 = vmatpush1.msra.mxu0 0.0
        %582 = vmatprep.subr.mxu0 0.0
        %583 = vmatpush1.msra.mxu0 0.0
        %584 = vmatprep.subr.mxu0 0.0
        %585 = vmatpush1.msra.mxu0 0.0
        %586 = vmatprep.subr.mxu0 0.0
        %587 = vmatpush1.msra.mxu0 0.0
        %588 = vmatprep.subr.mxu0 0.0
        %589 = vmatpush1.msra.mxu0 0.0
        %590 = vmatprep.subr.mxu0 0.0
        %591 = vmatpush1.msra.mxu0 0.0
        %592 = vmatprep.subr.mxu0 0.0
        %593 = vmatpush1.msra.mxu0 0.0
        %594 = vmatprep.subr.mxu0 0.0
        %595 = vmatpush1.msra.mxu0 0.0
        %596 = vmatprep.subr.mxu0 0.0
        %597 = vmatpush1.msra.mxu0 0.0
        %598 = vmatprep.subr.mxu0 0.0
        %599 = vmatpush1.msra.mxu0 0.0
        %600 = vmatprep.subr.mxu0 0.0
        %601 = vmatpush1.msra.mxu0 0.0
        %602 = vmatprep.subr.mxu0 0.0
        %603 = vmatpush1.msra.mxu0 0.0
        %604 = vmatprep.subr.mxu0 0.0
        %605 = vmatpush1.msra.mxu0 0.0
        %606 = vmatprep.subr.mxu0 0.0
        %607 = vmatpush1.msra.mxu0 0.0
        %608 = vmatprep.subr.mxu0 0.0
        %609 = vmatpush1.msra.mxu0 0.0
        %610 = vmatprep.subr.mxu0 0.0
        %611 = vmatpush1.msra.mxu0 0.0
        %612 = vmatprep.subr.mxu0 0.0
        %613 = vmatpush1.msra.mxu0 0.0
        %614 = vmatprep.subr.mxu0 0.0
        %615 = vmatpush1.msra.mxu0 0.0
        %616 = vmatprep.subr.mxu0 0.0
        %617 = vmatpush1.msra.mxu0 0.0
        %618 = vmatprep.subr.mxu0 0.0
        %619 = vmatpush1.msra.mxu0 0.0
        %620 = vmatprep.subr.mxu0 0.0
        %621 = vmatpush1.msra.mxu0 0.0
        %622 = vmatprep.subr.mxu0 0.0
        %623 = vmatpush1.msra.mxu0 0.0
        %624 = vmatprep.subr.mxu0 0.0
        %625 = vmatpush1.msra.mxu0 0.0
        %626 = vmatprep.subr.mxu0 0.0
        %627 = vmatpush1.msra.mxu0 0.0
        %628 = vmatprep.mubr.f32.mxu0 0.0
        %629 = vmatmul.mubr.f32.gmra.mrb[0].mxu0 %v409
        %v630 = vpop.f32.mrb[0].mxu0
        %v631 = vadd.f32 0.0, %v630
        %v632 = vpop.f32.mrb[0].mxu0
        %633 = vmatprep.mubr.f32.mxu0 0.0
        %634 = vmatmul.mubr.f32.gmra.mrb[0].mxu0 %v412
        %v635 = vpop.f32.mrb[0].mxu0
        %v636 = vadd.f32 0.0, %v635
        %v637 = vpop.f32.mrb[0].mxu0
        %638 = vdwg.mxu0
        %639 = vst.msk [vmem:[%s247] sm:$0xff] %vm294, %v481
        %640 = vst.msk [vmem:[%s247 + $0x8] sm:$0xff] %vm294, %v486
        %641 = vst.msk [vmem:[%s247 + $0x10] sm:$0xff] %vm294, %v556
        %642 = vst.msk [vmem:[%s247 + $0x18] sm:$0xff] %vm294, %v561
        %643 = vst.msk [vmem:[%s247 + $0x20] sm:$0xff] %vm294, %v631
        %644 = vst.msk [vmem:[%s247 + $0x28] sm:$0xff] %vm294, %v636
        %s645 = sand.u32 %s124, 1
        %s646 = scalar_lea.sflag [#allocation4], %s645
        %s647 = sand.u32 %s124, 1
        %s648 = smul.addr %s647, 48
        %s649 = scalar_lea.vmem [#allocation8], %s648
        // Predicated region
        $region45: #{tpu_custom_call.1} parent=31 // pred_check
          %p650 = pneg %p134
        $region46: #{tpu_custom_call.1} parent=31 // pred_check_branch
          %652 = sbr.rel (%p650) target = $region48
        $region47: #{tpu_custom_call.1} parent=31 // pred_region
          %s653 = smul.u32 2, %s27
          %s655 = ssub.s32 768, 768
          %656 = vsyncadd %s646, %s655
          %s657 = sadd.s32 %s28, %s653
          %s658 = smul.addr %s26, 6
          %s659 = sadd.s32 %s657, %s658
          %s660 = smul.addr %s659, 128
          %s661 = scalar_lea.hbm %s3, %s660
          %s662 = sshll.u32 %s649, 4
          %s663 = int_to_ptr.vmem [resolvable:$true] %s662
          %668 = dma.vmem_to_hbm [thread:$0]  %s663, 768, %s661, %s646, 128, 128, 8
        $region48: #{tpu_custom_call.1} parent=31 // pred_fallthru
          _
      $region32: #{tpu_custom_call.1} parent=5 // pred_fallthru
        _
      %p669 = scmp.le.s32.totalorder 2, %s16
      // Predicated region
      $region49: #{tpu_custom_call.1} parent=5 // pred_check
        %p670 = pneg %p669
      $region50: #{tpu_custom_call.1} parent=5 // pred_check_branch
        %672 = sbr.rel (%p670) target = $region52
      $region51: #{tpu_custom_call.1} parent=5 // pred_region
        %s673 = ssub.s32 %s16, 2
        // Predicated region
        $region53: #{tpu_custom_call.1} parent=51 // pred_check
          %p674 = pneg %p140
        $region54: #{tpu_custom_call.1} parent=51 // pred_check_branch
          %676 = sbr.rel (%p674) target = $region56
        $region55: #{tpu_custom_call.1} parent=51 // pred_region
          %s677 = sand.u32 %s125, 1
          %s678 = scalar_lea.sflag [#allocation4], %s677
          %s679 = sand.u32 %s125, 1
          %s680 = smul.addr %s679, 48
          %s681 = scalar_lea.vmem [#allocation8], %s680
          %682 = dma.done %s678, 768
        $region56: #{tpu_custom_call.1} parent=51 // pred_fallthru
          _
      $region52: #{tpu_custom_call.1} parent=5 // pred_fallthru
        _
    $region6: #{tpu_custom_call.1} parent=1 // loop_footer
      %s20 = sadd.s32 1, %s16
    $region7: #{tpu_custom_call.1} parent=1 // loop_footer_branch
      %15 = sbr.rel target = $region3
    $region8: #{tpu_custom_call.1} parent=1 // loop_exit
      _
    %683 = vsyncpa [#allocation3], 1
    %s684 = scalar_lea.sflag [#allocation3], 1
    %685 = vsyncpa %s684, 1
    %686 = vsyncpa [#allocation6], 1
    %687 = vsyncpa [#allocation4], 1
    %s688 = scalar_lea.sflag [#allocation4], 1
    %689 = vsyncpa %s688, 1

</llo_original>
